<compile_context>
chip_gen: v7x
topology: tpu7x:2x2x1
jax: 0.10.0
libtpu: 0.0.40
codegen_flags: <defaults>
</compile_context>

<pallas_src>
import functools
import math

import jax
import jax.numpy as jnp
from jax.experimental import pallas as pl
from jax.experimental.pallas import tpu as pltpu


def _round_up(x, m):
    return (x + m - 1) // m * m


def _choose_k_tiling(k_total, max_tile=512):
    """Pick (padded K, K tile, num K tiles) for the fused-gate contraction."""
    if k_total <= max_tile:
        kt = _round_up(k_total, 8)            # single K step, minimal padding
        return kt, kt, 1
    kt = _round_up(k_total, 128)              # K-tiled: tiles lane-128 aligned
    for t in range(max_tile, 127, -128):
        if kt % t == 0:
            return kt, t, kt // t
    return kt, 128, kt // 128


# ---------------------------------------------------------------------------
# Kernel: fused LSTM cell (single step) + decoder matmul, K-tiled contraction.
# Grid = (batch tiles, K tiles).  acc_ref is a persistent (BT, G) f32 scratch.
# ---------------------------------------------------------------------------
def _lstm_decoder_kernel(xh_ref, c_ref, w_ref, b_ref, wdec_ref, bdec_ref,
                         out_ref, h_out_ref, c_out_ref, acc_ref, *, hidden):
    k = pl.program_id(1)

    @pl.when(k == 0)
    def _():
        acc_ref[...] = jnp.zeros_like(acc_ref)

    # Partial gate matmul for this K tile: (BT, tk) bf16 @ (tk, G) bf16 -> f32.
    acc_ref[...] += jnp.dot(xh_ref[...], w_ref[...],
                            preferred_element_type=jnp.float32)

    @pl.when(k == pl.num_programs(1) - 1)
    def _():
        H = hidden
        gates = acc_ref[...] + b_ref[...]          # (BT, G) f32
        # PyTorch LSTM gate order, packed contiguously with stride H: i,f,g,o.
        # (Zero-cost views when H % 128 == 0; tiny relayout otherwise, dwarfed
        # by the weight-DMA savings of not padding each gate to 128 lanes.)
        i_g = jax.nn.sigmoid(gates[:, 0 * H:1 * H])
        f_g = jax.nn.sigmoid(gates[:, 1 * H:2 * H])
        g_g = jnp.tanh(gates[:, 2 * H:3 * H])
        o_g = jax.nn.sigmoid(gates[:, 3 * H:4 * H])

        c_new = f_g * c_ref[...] + i_g * g_g
        h_new = o_g * jnp.tanh(c_new)

        c_out_ref[...] = c_new
        h_out_ref[...] = h_new
        # Decoder: h_new @ W_dec^T + b_dec.
        out_ref[...] = (jnp.dot(h_new.astype(jnp.bfloat16), wdec_ref[...],
                                preferred_element_type=jnp.float32)
                        + bdec_ref[...])


def lstm_step_decode(xh_p, c_p, w_fused, b_fused, w_dec, b_dec,
                     *, hidden, out_dim, tk, nk):
    """One LSTM step + decoder.  xh_p: (Bp, Kt) bf16 packed [x, h]."""
    Bp, _ = xh_p.shape
    G = w_fused.shape[1]
    H, O = hidden, out_dim
    BT = Bp if Bp <= 128 else 128
    nb = Bp // BT

    # Rough per-call VMEM need (double-buffered blocks + accumulator); raise
    # the scoped limit above v5e's 16 MiB default, cap at v7x-safe 64 MiB.
    vmem_est = (2 * (BT * tk * 2 + tk * G * 2)
                + 2 * (BT * H * 4 + G * 4 + H * O * 2 + O * 4)
                + 2 * (BT * O * 4 + 2 * BT * H * 4)
                + BT * G * 4)
    vmem_limit = int(max(32 * 1024 * 1024,
                         min(64 * 1024 * 1024, 2 * vmem_est)))

    out, h_new, c_new = pl.pallas_call(
        functools.partial(_lstm_decoder_kernel, hidden=H),
        out_shape=(
            jax.ShapeDtypeStruct((Bp, O), jnp.float32),
            jax.ShapeDtypeStruct((Bp, H), jnp.float32),
            jax.ShapeDtypeStruct((Bp, H), jnp.float32),
        ),
        grid=(nb, nk),
        in_specs=[
            pl.BlockSpec((BT, tk), lambda i, k: (i, k)),   # xh  (bf16)
            pl.BlockSpec((BT, H), lambda i, k: (i, 0)),    # c   (f32)
            pl.BlockSpec((tk, G), lambda i, k: (k, 0)),    # fused gate weight
            pl.BlockSpec((1, G), lambda i, k: (0, 0)),     # fused gate bias
            pl.BlockSpec((H, O), lambda i, k: (0, 0)),     # decoder weight
            pl.BlockSpec((1, O), lambda i, k: (0, 0)),     # decoder bias
        ],
        out_specs=(
            pl.BlockSpec((BT, O), lambda i, k: (i, 0)),
            pl.BlockSpec((BT, H), lambda i, k: (i, 0)),
            pl.BlockSpec((BT, H), lambda i, k: (i, 0)),
        ),
        scratch_shapes=[pltpu.VMEM((BT, G), jnp.float32)],
        # Update cell state in place (realized when the caller donates c).
        input_output_aliases={1: 2},
        compiler_params=pltpu.CompilerParams(
            dimension_semantics=(
                "parallel" if nb > 1 else "arbitrary", "arbitrary"),
            vmem_limit_bytes=vmem_limit),
    )(xh_p, c_p, w_fused, b_fused, w_dec, b_dec)
    return out, h_new, c_new


# ---------------------------------------------------------------------------
# Parameters (PyTorch layouts) and fused/padded kernel layouts.
# ---------------------------------------------------------------------------
def init_params(key, input_size, hidden_size, output_size):
    H = hidden_size
    ks = jax.random.split(key, 7)
    bound = 1.0 / math.sqrt(H)
    u = lambda k, shape: jax.random.uniform(k, shape, jnp.float32, -bound, bound)
    return {
        "embedding": jax.random.normal(ks[0], (input_size, H), jnp.float32),
        "w_ih": u(ks[1], (4 * H, H)),     # nn.LSTM weight_ih_l0
        "w_hh": u(ks[2], (4 * H, H)),     # nn.LSTM weight_hh_l0
        "b_ih": u(ks[3], (4 * H,)),
        "b_hh": u(ks[4], (4 * H,)),
        "w_dec": u(ks[5], (output_size, H)),   # nn.Linear weight
        "b_dec": u(ks[6], (output_size,)),
    }


def prepare_params(params, hidden_size, output_size):
    """Build fused, contiguously gate-packed, bf16 weight layouts."""
    H, O = hidden_size, output_size
    G = _round_up(4 * H, 128)                # pad TOTAL gate width once
    Kt, tk, nk = _choose_k_tiling(2 * H)     # pad contraction 2H once

    # Rows [0:H) = W_ih^T, [H:2H) = W_hh^T; gates already contiguous (i,f,g,o)
    # in PyTorch's (4H, H) layout, so the transpose is the packing.
    w_fused = jnp.zeros((Kt, G), jnp.float32)
    w_fused = w_fused.at[:H, :4 * H].set(params["w_ih"].T)
    w_fused = w_fused.at[H:2 * H, :4 * H].set(params["w_hh"].T)
    b_fused = jnp.zeros((1, G), jnp.float32)
    b_fused = b_fused.at[0, :4 * H].set(params["b_ih"] + params["b_hh"])

    return {
        "emb": params["embedding"],
        "w_fused": w_fused.astype(jnp.bfloat16),
        "b_fused": b_fused,
        "w_dec": params["w_dec"].T.astype(jnp.bfloat16),   # (H, O)
        "b_dec": params["b_dec"][None, :],                  # (1, O)
        "Kt": Kt, "tk": tk, "nk": nk,
    }


def make_rnn_forward(prepped, hidden_size, output_size):
    """Mirrors RNN.forward: inp (B,) int tokens, hidden=(h0, c0) each (1,B,H).
    The whole step (embedding gather, padding, kernel, slicing) is one jit."""
    H, O = hidden_size, output_size
    emb = prepped["emb"]
    Kt, tk, nk = prepped["Kt"], prepped["tk"], prepped["nk"]

    @jax.jit
    def forward(inp, hidden):
        h0, c0 = hidden
        B = inp.shape[0]
        BT = 128 if B > 128 else _round_up(max(B, 8), 8)
        Bp = _round_up(B, BT)                # multiple of BT -> no dropped rows

        # Embedding gather (data-dependent row gather stays in plain JAX).
        x = jnp.take(emb, inp, axis=0)                       # (B, H) f32

        # Packed bf16 [x, h] slab; padding fused by XLA, no in-kernel copies.
        xh = jnp.zeros((Bp, Kt), jnp.bfloat16)
        xh = xh.at[:B, :H].set(x.astype(jnp.bfloat16))
        xh = xh.at[:B, H:2 * H].set(h0[0].astype(jnp.bfloat16))
        c_p = jnp.zeros((Bp, H), jnp.float32).at[:B].set(c0[0])

        out_p, h_new_p, c_new_p = lstm_step_decode(
            xh, c_p, prepped["w_fused"], prepped["b_fused"],
            prepped["w_dec"], prepped["b_dec"],
            hidden=H, out_dim=O, tk=tk, nk=nk)

        output = out_p[:B]
        h1 = h_new_p[:B][None, :, :]
        c1 = c_new_p[:B][None, :, :]
        return output, (h1, c1)

    return forward


def reference_forward(params, inp, hidden):
    """Pure-JAX f32 reference of the PyTorch module forward."""
    h0, c0 = hidden
    x = jnp.take(params["embedding"], inp, axis=0)
    h, c = h0[0], c0[0]
    H = h.shape[-1]
    gates = (x @ params["w_ih"].T + h @ params["w_hh"].T
             + params["b_ih"] + params["b_hh"])
    i_g = jax.nn.sigmoid(gates[:, 0 * H:1 * H])
    f_g = jax.nn.sigmoid(gates[:, 1 * H:2 * H])
    g_g = jnp.tanh(gates[:, 2 * H:3 * H])
    o_g = jax.nn.sigmoid(gates[:, 3 * H:4 * H])
    c_new = f_g * c + i_g * g_g
    h_new = o_g * jnp.tanh(c_new)
    out = h_new @ params["w_dec"].T + params["b_dec"]
    return out, (h_new[None], c_new[None])


if __name__ == "__main__":
    input_size = 16      # vocab size
    hidden_size = 32
    output_size = 16
    batch = 2

    key = jax.random.PRNGKey(0)
    k_param, k_inp = jax.random.split(key)
    params = init_params(k_param, input_size, hidden_size, output_size)
    prepped = prepare_params(params, hidden_size, output_size)
    forward = make_rnn_forward(prepped, hidden_size, output_size)

    inp = jax.random.randint(k_inp, (batch,), 0, input_size, dtype=jnp.int32)
    h0 = jnp.zeros((1, batch, hidden_size), jnp.float32)
    c0 = jnp.zeros((1, batch, hidden_size), jnp.float32)

    output, (h1, c1) = forward(inp, (h0, c0))
    jax.block_until_ready((output, h1, c1))

    assert output.shape == (batch, output_size)
    assert h1.shape == (1, batch, hidden_size)
    assert c1.shape == (1, batch, hidden_size)
    assert bool(jnp.all(jnp.isfinite(output)))

    # Correctness vs. f32 reference (bf16 weights -> loose tolerance).
    ref_out, (ref_h, ref_c) = reference_forward(params, inp, (h0, c0))
    assert bool(jnp.allclose(output, ref_out, atol=3e-2, rtol=3e-2))
    assert bool(jnp.allclose(h1, ref_h, atol=3e-2, rtol=3e-2))
    assert bool(jnp.allclose(c1, ref_c, atol=3e-2, rtol=3e-2))

    print("KERNEL_OK")
</pallas_src>

<mosaic_0001>
module attributes {stable_mosaic.version = 11 : i64} {
  func.func @_lstm_decoder_kernel(%arg0: i32, %arg1: i32, %arg2: memref<8x64xbf16, #tpu.memory_space<vmem>>, %arg3: memref<8x32xf32, #tpu.memory_space<vmem>>, %arg4: memref<64x128xbf16, #tpu.memory_space<vmem>>, %arg5: memref<1x128xf32, #tpu.memory_space<vmem>>, %arg6: memref<32x16xbf16, #tpu.memory_space<vmem>>, %arg7: memref<1x16xf32, #tpu.memory_space<vmem>>, %arg8: memref<8x16xf32, #tpu.memory_space<vmem>>, %arg9: memref<8x32xf32, #tpu.memory_space<vmem>>, %arg10: memref<8x32xf32, #tpu.memory_space<vmem>>, %arg11: memref<8x128xf32, #tpu.memory_space<vmem>>) attributes {dimension_semantics = [#tpu.dimension_semantics<arbitrary>, #tpu.dimension_semantics<arbitrary>], iteration_bounds = array<i64: 1, 1>, scalar_prefetch = 0 : i64, scratch_operands = 1 : i64, tpu.core_type = #tpu.core_type<tc>, window_params = [{transform_indices = @transform_0, window_bounds = array<i64: 8, 64>}, {transform_indices = @transform_1, window_bounds = array<i64: 8, 32>}, {transform_indices = @transform_2, window_bounds = array<i64: 64, 128>}, {pipeline_mode = #tpu.pipeline_mode<synchronous>, transform_indices = @transform_3, window_bounds = array<i64: 1, 128>}, {pipeline_mode = #tpu.pipeline_mode<synchronous>, transform_indices = @transform_4, window_bounds = array<i64: 32, 16>}, {pipeline_mode = #tpu.pipeline_mode<synchronous>, transform_indices = @transform_5, window_bounds = array<i64: 1, 16>}, {transform_indices = @transform_6, window_bounds = array<i64: 8, 16>}, {transform_indices = @transform_7, window_bounds = array<i64: 8, 32>}, {transform_indices = @transform_8, window_bounds = array<i64: 8, 32>}]} {
    %c0_i32 = arith.constant 0 : i32
    %0 = arith.cmpi eq, %arg1, %c0_i32 : i32
    %1 = arith.extui %0 : i1 to i32
    %c0_i32_0 = arith.constant 0 : i32
    %2 = arith.cmpi ne, %1, %c0_i32_0 : i32
    scf.if %2 {
      %cst_10 = arith.constant 0.000000e+00 : f32
      %12 = vector.broadcast %cst_10 : f32 to vector<8x128xf32>
      %c0_11 = arith.constant 0 : index
      %c0_12 = arith.constant 0 : index
      %13 = vector.load %arg11[%c0_11, %c0_12] : memref<8x128xf32, #tpu.memory_space<vmem>>, vector<8x128xf32>
      tpu.vector_store %arg11[%c0_11, %c0_12], %12 {strides = array<i32>} : memref<8x128xf32, #tpu.memory_space<vmem>>, vector<8x128xf32>,
    } else {
    }
    %c0 = arith.constant 0 : index
    %c0_1 = arith.constant 0 : index
    %3 = vector.load %arg11[%c0, %c0_1] : memref<8x128xf32, #tpu.memory_space<vmem>>, vector<8x128xf32>
    %c0_2 = arith.constant 0 : index
    %c0_3 = arith.constant 0 : index
    %4 = vector.load %arg2[%c0_2, %c0_3] : memref<8x64xbf16, #tpu.memory_space<vmem>>, vector<8x64xbf16>
    %c0_4 = arith.constant 0 : index
    %c0_5 = arith.constant 0 : index
    %5 = vector.load %arg4[%c0_4, %c0_5] : memref<64x128xbf16, #tpu.memory_space<vmem>>, vector<64x128xbf16>
    %cst = arith.constant dense<0.000000e+00> : vector<8x128xf32>
    %6 = tpu.matmul %4, %5, %cst {dimension_numbers = #tpu.dot_dimension_numbers<[1], [0], [0], [1], [0, 0, 1, 1], [], []>} : vector<8x64xbf16>, vector<64x128xbf16>, vector<8x128xf32> -> vector<8x128xf32>
    %7 = arith.addf %3, %6 : vector<8x128xf32>
    %c0_6 = arith.constant 0 : index
    %c0_7 = arith.constant 0 : index
    %8 = vector.load %arg11[%c0_6, %c0_7] : memref<8x128xf32, #tpu.memory_space<vmem>>, vector<8x128xf32>
    tpu.vector_store %arg11[%c0_6, %c0_7], %7 {strides = array<i32>} : memref<8x128xf32, #tpu.memory_space<vmem>>, vector<8x128xf32>,
    %c0_i32_8 = arith.constant 0 : i32
    %9 = arith.cmpi eq, %arg1, %c0_i32_8 : i32
    %10 = arith.extui %9 : i1 to i32
    %c0_i32_9 = arith.constant 0 : i32
    %11 = arith.cmpi ne, %10, %c0_i32_9 : i32
    scf.if %11 {
      %c0_10 = arith.constant 0 : index
      %c0_11 = arith.constant 0 : index
      %12 = vector.load %arg11[%c0_10, %c0_11] : memref<8x128xf32, #tpu.memory_space<vmem>>, vector<8x128xf32>
      %c0_12 = arith.constant 0 : index
      %c0_13 = arith.constant 0 : index
      %13 = vector.load %arg5[%c0_12, %c0_13] : memref<1x128xf32, #tpu.memory_space<vmem>>, vector<1x128xf32>
      %14 = vector.broadcast %13 : vector<1x128xf32> to vector<8x128xf32>
      %15 = arith.addf %12, %14 : vector<8x128xf32>
      %16 = vector.extract_strided_slice %15 {offsets = [0, 0], sizes = [8, 32], strides = [1, 1]} : vector<8x128xf32> to vector<8x32xf32>
      %17 = arith.negf %16 : vector<8x32xf32>
      %18 = math.exp %17 : vector<8x32xf32>
      %cst_14 = arith.constant 1.000000e+00 : f32
      %19 = vector.broadcast %cst_14 : f32 to vector<8x32xf32>
      %20 = arith.addf %19, %18 : vector<8x32xf32>
      %21 = arith.divf %19, %20 : vector<8x32xf32>
      %22 = vector.extract_strided_slice %15 {offsets = [0, 32], sizes = [8, 32], strides = [1, 1]} : vector<8x128xf32> to vector<8x32xf32>
      %23 = arith.negf %22 : vector<8x32xf32>
      %24 = math.exp %23 : vector<8x32xf32>
      %cst_15 = arith.constant 1.000000e+00 : f32
      %25 = vector.broadcast %cst_15 : f32 to vector<8x32xf32>
      %26 = arith.addf %25, %24 : vector<8x32xf32>
      %27 = arith.divf %25, %26 : vector<8x32xf32>
      %28 = vector.extract_strided_slice %15 {offsets = [0, 64], sizes = [8, 32], strides = [1, 1]} : vector<8x128xf32> to vector<8x32xf32>
      %29 = math.tanh %28 : vector<8x32xf32>
      %30 = vector.extract_strided_slice %15 {offsets = [0, 96], sizes = [8, 32], strides = [1, 1]} : vector<8x128xf32> to vector<8x32xf32>
      %31 = arith.negf %30 : vector<8x32xf32>
      %32 = math.exp %31 : vector<8x32xf32>
      %cst_16 = arith.constant 1.000000e+00 : f32
      %33 = vector.broadcast %cst_16 : f32 to vector<8x32xf32>
      %34 = arith.addf %33, %32 : vector<8x32xf32>
      %35 = arith.divf %33, %34 : vector<8x32xf32>
      %c0_17 = arith.constant 0 : index
      %c0_18 = arith.constant 0 : index
      %36 = vector.load %arg3[%c0_17, %c0_18] : memref<8x32xf32, #tpu.memory_space<vmem>>, vector<8x32xf32>
      %37 = arith.mulf %27, %36 : vector<8x32xf32>
      %38 = arith.mulf %21, %29 : vector<8x32xf32>
      %39 = arith.addf %37, %38 : vector<8x32xf32>
      %40 = math.tanh %39 : vector<8x32xf32>
      %41 = arith.mulf %35, %40 : vector<8x32xf32>
      %c0_19 = arith.constant 0 : index
      %c0_20 = arith.constant 0 : index
      %42 = vector.load %arg10[%c0_19, %c0_20] : memref<8x32xf32, #tpu.memory_space<vmem>>, vector<8x32xf32>
      tpu.vector_store %arg10[%c0_19, %c0_20], %39 {strides = array<i32>} : memref<8x32xf32, #tpu.memory_space<vmem>>, vector<8x32xf32>,
      %c0_21 = arith.constant 0 : index
      %c0_22 = arith.constant 0 : index
      %43 = vector.load %arg9[%c0_21, %c0_22] : memref<8x32xf32, #tpu.memory_space<vmem>>, vector<8x32xf32>
      tpu.vector_store %arg9[%c0_21, %c0_22], %41 {strides = array<i32>} : memref<8x32xf32, #tpu.memory_space<vmem>>, vector<8x32xf32>,
      %44 = arith.truncf %41 : vector<8x32xf32> to vector<8x32xbf16>
      %c0_23 = arith.constant 0 : index
      %c0_24 = arith.constant 0 : index
      %45 = vector.load %arg6[%c0_23, %c0_24] : memref<32x16xbf16, #tpu.memory_space<vmem>>, vector<32x16xbf16>
      %cst_25 = arith.constant dense<0.000000e+00> : vector<8x16xf32>
      %46 = tpu.matmul %44, %45, %cst_25 {dimension_numbers = #tpu.dot_dimension_numbers<[1], [0], [0], [1], [0, 0, 1, 1], [], []>} : vector<8x32xbf16>, vector<32x16xbf16>, vector<8x16xf32> -> vector<8x16xf32>
      %c0_26 = arith.constant 0 : index
      %c0_27 = arith.constant 0 : index
      %47 = vector.load %arg7[%c0_26, %c0_27] : memref<1x16xf32, #tpu.memory_space<vmem>>, vector<1x16xf32>
      %48 = vector.broadcast %47 : vector<1x16xf32> to vector<8x16xf32>
      %49 = arith.addf %46, %48 : vector<8x16xf32>
      %c0_28 = arith.constant 0 : index
      %c0_29 = arith.constant 0 : index
      %50 = vector.load %arg8[%c0_28, %c0_29] : memref<8x16xf32, #tpu.memory_space<vmem>>, vector<8x16xf32>
      tpu.vector_store %arg8[%c0_28, %c0_29], %49 {strides = array<i32>} : memref<8x16xf32, #tpu.memory_space<vmem>>, vector<8x16xf32>,
    } else {
    }
    return
  }
  func.func @transform_0(%arg0: i32, %arg1: i32) -> (i32, i32) {
    %c0_i32 = arith.constant 0 : i32
    return %arg0, %arg1 : i32, i32
  }
  func.func @transform_1(%arg0: i32, %arg1: i32) -> (i32, i32) {
    %c0_i32 = arith.constant 0 : i32
    %c0_i32_0 = arith.constant 0 : i32
    return %arg0, %c0_i32 : i32, i32
  }
  func.func @transform_2(%arg0: i32, %arg1: i32) -> (i32, i32) {
    %c0_i32 = arith.constant 0 : i32
    %c0_i32_0 = arith.constant 0 : i32
    return %arg1, %c0_i32 : i32, i32
  }
  func.func @transform_3(%arg0: i32, %arg1: i32) -> (i32, i32) {
    %c0_i32 = arith.constant 0 : i32
    %c0_i32_0 = arith.constant 0 : i32
    %c0_i32_1 = arith.constant 0 : i32
    return %c0_i32, %c0_i32_0 : i32, i32
  }
  func.func @transform_4(%arg0: i32, %arg1: i32) -> (i32, i32) {
    %c0_i32 = arith.constant 0 : i32
    %c0_i32_0 = arith.constant 0 : i32
    %c0_i32_1 = arith.constant 0 : i32
    return %c0_i32, %c0_i32_0 : i32, i32
  }
  func.func @transform_5(%arg0: i32, %arg1: i32) -> (i32, i32) {
    %c0_i32 = arith.constant 0 : i32
    %c0_i32_0 = arith.constant 0 : i32
    %c0_i32_1 = arith.constant 0 : i32
    return %c0_i32, %c0_i32_0 : i32, i32
  }
  func.func @transform_6(%arg0: i32, %arg1: i32) -> (i32, i32) {
    %c0_i32 = arith.constant 0 : i32
    %c0_i32_0 = arith.constant 0 : i32
    return %arg0, %c0_i32 : i32, i32
  }
  func.func @transform_7(%arg0: i32, %arg1: i32) -> (i32, i32) {
    %c0_i32 = arith.constant 0 : i32
    %c0_i32_0 = arith.constant 0 : i32
    return %arg0, %c0_i32 : i32, i32
  }
  func.func @transform_8(%arg0: i32, %arg1: i32) -> (i32, i32) {
    %c0_i32 = arith.constant 0 : i32
    %c0_i32_0 = arith.constant 0 : i32
    return %arg0, %c0_i32 : i32, i32
  }
}

</mosaic_0001>

<llo_original>
// kernel: forward.1
$region0: #{forward.1}
  #allocation0 [shape = 'u32[]', space=smem, size = 0x4, offset = 0x4, fixed_abs, tag = 'smem constant byte address 0x4 - core index']
  #allocation1 [shape = 'u32[144,128]{1,0:T(1,128)}', space=vmem, size = 0x12000, scoped, tag = 'internal scratch']
  #allocation2 [shape = 'f32[8,128]{1,0:T(8,128)}', space=vmem, size = 0x1000, scoped, tag = 'scratch operand']
  %s0 = inlined_call_operand.vmem [shape: bf16[8,64], index: 0, kind: input, shape index: {}]
  %s1 = inlined_call_operand.vmem [shape: f32[8,32], index: 1, kind: input, shape index: {}, may-alias: {1,8}]
  %s2 = inlined_call_operand.vmem [shape: bf16[64,128], index: 2, kind: input, shape index: {}]
  %s3 = inlined_call_operand.vmem [shape: f32[1,128], index: 3, kind: input, shape index: {}]
  %s4 = inlined_call_operand.vmem [shape: bf16[32,16], index: 4, kind: input, shape index: {}]
  %s5 = inlined_call_operand.vmem [shape: f32[1,16], index: 5, kind: input, shape index: {}]
  %s6 = inlined_call_operand.vmem [shape: f32[8,16], index: 6, kind: output, shape index: {0}]
  %s7 = inlined_call_operand.vmem [shape: f32[8,32], index: 7, kind: output, shape index: {1}]
  %s8 = inlined_call_operand.vmem [shape: f32[8,32], index: 8, kind: output, shape index: {2}, may-alias: {1,8}]
  %9 = xla_tuple %s6, %s7, %s8
  %s10 = sld [smem:[#allocation0]]
  $region58: #{forward.1} parent=0
    _
  %s12 = ssub.s32 1, %s10
  %s13 = scalar_select 0, %s12, %s10
  // Predicated region
  $region2: #{forward.1} parent=0 // pred_check
    _
  $region3: #{forward.1} parent=0 // pred_check_branch
    %15 = sbr.rel (0) target = $region5
  $region4: #{forward.1} parent=0 // pred_region
    _
  $region5: #{forward.1} parent=0 // pred_fallthru
    _
  // Predicated region
  $region6: #{forward.1} parent=0 // pred_check
    _
  $region7: #{forward.1} parent=0 // pred_check_branch
    %17 = sbr.rel (0) target = $region9
  $region8: #{forward.1} parent=0 // pred_region
    _
  $region9: #{forward.1} parent=0 // pred_fallthru
    _
  // Predicated region
  $region10: #{forward.1} parent=0 // pred_check
    _
  $region11: #{forward.1} parent=0 // pred_check_branch
    %19 = sbr.rel (0) target = $region13
  $region12: #{forward.1} parent=0 // pred_region
    _
  $region13: #{forward.1} parent=0 // pred_fallthru
    _
  // Predicated region
  $region14: #{forward.1} parent=0 // pred_check
    _
  $region15: #{forward.1} parent=0 // pred_check_branch
    %21 = sbr.rel (0) target = $region17
  $region16: #{forward.1} parent=0 // pred_region
    _
  $region17: #{forward.1} parent=0 // pred_fallthru
    _
  // Predicated region
  $region18: #{forward.1} parent=0 // pred_check
    _
  $region19: #{forward.1} parent=0 // pred_check_branch
    %23 = sbr.rel (0) target = $region21
  $region20: #{forward.1} parent=0 // pred_region
    _
  $region21: #{forward.1} parent=0 // pred_fallthru
    _
  // Predicated region
  $region22: #{forward.1} parent=0 // pred_check
    _
  $region23: #{forward.1} parent=0 // pred_check_branch
    %25 = sbr.rel (0) target = $region25
  $region24: #{forward.1} parent=0 // pred_region
    _
  $region25: #{forward.1} parent=0 // pred_fallthru
    _
  %p27 = scmp.eq.s32.totalorder 0, 0
  // Predicated region
  $region26: #{forward.1} parent=0 // pred_check
    %p28 = pneg %p27
  $region27: #{forward.1} parent=0 // pred_check_branch
    %30 = sbr.rel (%p28) target = $region29
  $region28: #{forward.1} parent=0 // pred_region
    %31 = vst [vmem:[#allocation2] sm:$0xff] 0.0
  $region29: #{forward.1} parent=0 // pred_fallthru
    _
  %v32 = vld [vmem:[#allocation2] sm:$0xff]
  %v33 = vld [vmem:[%s0] sm:$0xf]
  %v34 = vld [vmem:[%s2] sm:$0xf]
  %v35 = vld [vmem:[%s2 + $0x4] sm:$0xf]
  %v36 = vld [vmem:[%s2 + $0x8] sm:$0xf]
  %v37 = vld [vmem:[%s2 + $0xc] sm:$0xf]
  %v38 = vld [vmem:[%s2 + $0x10] sm:$0xf]
  %v39 = vld [vmem:[%s2 + $0x14] sm:$0xf]
  %v40 = vld [vmem:[%s2 + $0x18] sm:$0xf]
  %v41 = vld [vmem:[%s2 + $0x1c] sm:$0xf]
  %v50 = vunpack.c.l.b16 %v34
  %v51 = vunpack.c.l.b16 %v35
  %v52 = vunpack.c.l.b16 %v36
  %v53 = vunpack.c.l.b16 %v37
  %v54 = vunpack.c.l.b16 %v38
  %v55 = vunpack.c.l.b16 %v39
  %v56 = vunpack.c.l.b16 %v40
  %v57 = vunpack.c.l.b16 %v41
  %v58 = vpack.c.b16 %v51, %v50
  %v59 = vpack.c.b16 %v53, %v52
  %v60 = vpack.c.b16 %v55, %v54
  %v61 = vpack.c.b16 %v57, %v56
  %vm66 = vcmask 523264
  %v68 = vsel %vm66, %v33, 0
  %70 = vmatprep.subr.bf16.mxu0 0
  %71 = vmatpush1.bf16.msra.mxu0 %v58
  %72 = vmatprep.subr.bf16.mxu0 0
  %73 = vmatpush1.bf16.msra.mxu0 %v59
  %74 = vmatprep.subr.bf16.mxu0 0
  %75 = vmatpush1.bf16.msra.mxu0 %v60
  %76 = vmatprep.subr.bf16.mxu0 0
  %77 = vmatpush1.bf16.msra.mxu0 %v61
  %78 = vmatprep.subr.bf16.mxu0 0
  %79 = vmatpush1.bf16.msra.mxu0 0
  %80 = vmatprep.subr.bf16.mxu0 0
  %81 = vmatpush1.bf16.msra.mxu0 0
  %82 = vmatprep.subr.bf16.mxu0 0
  %83 = vmatpush1.bf16.msra.mxu0 0
  %84 = vmatprep.subr.bf16.mxu0 0
  %85 = vmatpush1.bf16.msra.mxu0 0
  %86 = vmatprep.subr.bf16.mxu0 0
  %87 = vmatpush1.bf16.msra.mxu0 0
  %88 = vmatprep.subr.bf16.mxu0 0
  %89 = vmatpush1.bf16.msra.mxu0 0
  %90 = vmatprep.subr.bf16.mxu0 0
  %91 = vmatpush1.bf16.msra.mxu0 0
  %92 = vmatprep.subr.bf16.mxu0 0
  %93 = vmatpush1.bf16.msra.mxu0 0
  %94 = vmatprep.subr.bf16.mxu0 0
  %95 = vmatpush1.bf16.msra.mxu0 0
  %96 = vmatprep.subr.bf16.mxu0 0
  %97 = vmatpush1.bf16.msra.mxu0 0
  %98 = vmatprep.subr.bf16.mxu0 0
  %99 = vmatpush1.bf16.msra.mxu0 0
  %100 = vmatprep.subr.bf16.mxu0 0
  %101 = vmatpush1.bf16.msra.mxu0 0
  %102 = vmatprep.mubr.bf16.mxu0 0
  %103 = vmatmul.mubr.bf16.gmra.mrb[0].mxu0 %v68
  %v104 = vpop.f32.mrb[0].mxu0
  %v105 = vadd.f32 0.0, %v104
  %v106 = vpop.f32.mrb[0].mxu0
  %v107 = vpop.f32.mrb[0].mxu0
  %v108 = vpop.f32.mrb[0].mxu0
  %109 = vdwg.mxu0
  %v110 = vadd.f32 %v32, %v105
  %111 = vst [vmem:[#allocation2] sm:$0xff] %v110
  // Predicated region
  $region30: #{forward.1} parent=0 // pred_check
    %p112 = pneg %p27
  $region31: #{forward.1} parent=0 // pred_check_branch
    %114 = sbr.rel (%p112) target = $region33
  $region32: #{forward.1} parent=0 // pred_region
    %v115 = vld [vmem:[#allocation2] sm:$0xff]
    %v116 = vld [vmem:[%s3] sm:$0x1]
    %v118 = vlaneseq
    %v119 = vshrl.u32 %v118, 7
    %v120 = vsub.s32 0, %v119
    %v121 = vrot.slane %v116, %v120
    %v123 = vadd.f32 %v115, %v121
    %v124 = vxor.u32 %v123, 2147483648
    %v125 = vmul.f32 %v124, 1.442695
    %v126 = vpow.pop %v125
    %v127 = vadd.f32 %v126, 1.0
    %v128 = vrcp.pop %v127
    %v129 = vmul.f32 1.0, %v128
    %v130 = vtanh.pop %v123
    %v131 = vld [vmem:[%s1] sm:$0xff]
    %133 = vrot.lane.b32.xlu0 %v131, 32
    %v134 = vpop.permute.xlu0 %133
    %v136 = vmul.f32 %v129, %v134
    %138 = vrot.lane.b32.xlu0 %v130, 64
    %v139 = vpop.permute.xlu0 %138
    %v141 = vmul.f32 %v129, %v139
    %143 = vrot.lane.b32.xlu0 %v141, 32
    %v144 = vpop.permute.xlu0 %143
    %v146 = vadd.f32 %v136, %v144
    %v147 = vtanh.pop %v146
    %149 = vrot.lane.b32.xlu0 %v147, 64
    %v150 = vpop.permute.xlu0 %149
    %v152 = vmul.f32 %v129, %v150
    %154 = vrot.lane.b32.xlu0 %v146, 96
    %v155 = vpop.permute.xlu0 %154
    %vm157 = vcmask 261120
    %158 = vst.msk [vmem:[%s8] sm:$0xff] %vm157, %v155
    %160 = vrot.lane.b32.xlu0 %v152, 32
    %v161 = vpop.permute.xlu0 %160
    %163 = vst.msk [vmem:[%s7] sm:$0xff] %vm157, %v161
    %v164 = vpack.c.bf16 %v152, %v152
    %v165 = vld [vmem:[%s4] sm:$0xf]
    %v166 = vld [vmem:[%s4 + $0x4] sm:$0xf]
    %v167 = vld [vmem:[%s4 + $0x8] sm:$0xf]
    %v168 = vld [vmem:[%s4 + $0xc] sm:$0xf]
    %v169 = vld [vmem:[%s5] sm:$0x1]
    %v171 = vlaneseq
    %v172 = vshrl.u32 %v171, 7
    %v173 = vsub.s32 0, %v172
    %v174 = vrot.slane %v169, %v173
    %177 = vrot.lane.b32.xlu0 %v164, 32
    %v178 = vpop.permute.xlu0 %177
    %v183 = vunpack.c.l.b16 %v165
    %v184 = vunpack.c.l.b16 %v166
    %v185 = vunpack.c.l.b16 %v167
    %v186 = vunpack.c.l.b16 %v168
    %v187 = vpack.c.b16 %v184, %v183
    %v188 = vpack.c.b16 %v186, %v185
    %v192 = vsel %vm157, %v178, 0
    %194 = vmatprep.subr.bf16.mxu0 0
    %195 = vmatpush1.bf16.msra.mxu0 %v187
    %196 = vmatprep.subr.bf16.mxu0 0
    %197 = vmatpush1.bf16.msra.mxu0 %v188
    %198 = vmatprep.subr.bf16.mxu0 0
    %199 = vmatpush1.bf16.msra.mxu0 0
    %200 = vmatprep.subr.bf16.mxu0 0
    %201 = vmatpush1.bf16.msra.mxu0 0
    %202 = vmatprep.subr.bf16.mxu0 0
    %203 = vmatpush1.bf16.msra.mxu0 0
    %204 = vmatprep.subr.bf16.mxu0 0
    %205 = vmatpush1.bf16.msra.mxu0 0
    %206 = vmatprep.subr.bf16.mxu0 0
    %207 = vmatpush1.bf16.msra.mxu0 0
    %208 = vmatprep.subr.bf16.mxu0 0
    %209 = vmatpush1.bf16.msra.mxu0 0
    %210 = vmatprep.subr.bf16.mxu0 0
    %211 = vmatpush1.bf16.msra.mxu0 0
    %212 = vmatprep.subr.bf16.mxu0 0
    %213 = vmatpush1.bf16.msra.mxu0 0
    %214 = vmatprep.subr.bf16.mxu0 0
    %215 = vmatpush1.bf16.msra.mxu0 0
    %216 = vmatprep.subr.bf16.mxu0 0
    %217 = vmatpush1.bf16.msra.mxu0 0
    %218 = vmatprep.subr.bf16.mxu0 0
    %219 = vmatpush1.bf16.msra.mxu0 0
    %220 = vmatprep.subr.bf16.mxu0 0
    %221 = vmatpush1.bf16.msra.mxu0 0
    %222 = vmatprep.subr.bf16.mxu0 0
    %223 = vmatpush1.bf16.msra.mxu0 0
    %224 = vmatprep.subr.bf16.mxu0 0
    %225 = vmatpush1.bf16.msra.mxu0 0
    %226 = vmatprep.mubr.bf16.mxu0 0
    %227 = vmatmul.mubr.bf16.gmra.mrb[0].mxu0 %v192
    %v228 = vpop.f32.mrb[0].mxu0
    %v229 = vadd.f32 %v174, %v228
    %v230 = vpop.f32.mrb[0].mxu0
    %v231 = vpop.f32.mrb[0].mxu0
    %v232 = vpop.f32.mrb[0].mxu0
    %233 = vdwg.mxu0
    %vm234 = vcmask 130048
    %235 = vst.msk [vmem:[%s6] sm:$0xff] %vm234, %v229
  $region33: #{forward.1} parent=0 // pred_fallthru
    _
  // Predicated region
  $region34: #{forward.1} parent=0 // pred_check
    _
  $region35: #{forward.1} parent=0 // pred_check_branch
    %237 = sbr.rel (0) target = $region37
  $region36: #{forward.1} parent=0 // pred_region
    _
  $region37: #{forward.1} parent=0 // pred_fallthru
    _
  // Predicated region
  $region38: #{forward.1} parent=0 // pred_check
    _
  $region39: #{forward.1} parent=0 // pred_check_branch
    %239 = sbr.rel (0) target = $region41
  $region40: #{forward.1} parent=0 // pred_region
    _
  $region41: #{forward.1} parent=0 // pred_fallthru
    _
  // Predicated region
  $region42: #{forward.1} parent=0 // pred_check
    _
  $region43: #{forward.1} parent=0 // pred_check_branch
    %241 = sbr.rel (0) target = $region45
  $region44: #{forward.1} parent=0 // pred_region
    _
  $region45: #{forward.1} parent=0 // pred_fallthru
    _
  // Predicated region
  $region46: #{forward.1} parent=0 // pred_check
    _
  $region47: #{forward.1} parent=0 // pred_check_branch
    %243 = sbr.rel (0) target = $region49
  $region48: #{forward.1} parent=0 // pred_region
    _
  $region49: #{forward.1} parent=0 // pred_fallthru
    _
  // Predicated region
  $region50: #{forward.1} parent=0 // pred_check
    _
  $region51: #{forward.1} parent=0 // pred_check_branch
    %245 = sbr.rel (0) target = $region53
  $region52: #{forward.1} parent=0 // pred_region
    _
  $region53: #{forward.1} parent=0 // pred_fallthru
    _
  // Predicated region
  $region54: #{forward.1} parent=0 // pred_check
    _
  $region55: #{forward.1} parent=0 // pred_check_branch
    %247 = sbr.rel (0) target = $region57
  $region56: #{forward.1} parent=0 // pred_region
    _
  $region57: #{forward.1} parent=0 // pred_fallthru
    _

</llo_original>
